<compile_context>
chip_gen: v5e
topology: v5e:2x2
jax: 0.10.0
libtpu: 0.0.40
codegen_flags: <defaults>
</compile_context>

<pallas_src>
import math

import jax
import jax.numpy as jnp
from jax import lax
from jax.experimental import pallas as pl
from jax.experimental.pallas import tpu as pltpu


# --------------------------------------------------------------------------- #
# Kernels
# --------------------------------------------------------------------------- #


def _embeddings_gather_kernel(ids_ref, pe_ref, emb_hbm, out_ref, buf, sems):
    """Large-vocab path: table stays in HBM, rows are DMA-gathered per tile.

    ids_ref : SMEM (B * S_pad,) int32   scalar prefetch (already clamped)
    pe_ref  : VMEM (TILE_S, D)          PE slab for this seq tile
    emb_hbm : HBM  (V, D)               embedding table (manual row gather)
    out_ref : VMEM (TILE_S, D)          output tile of flattened (B*S_pad, D)
    buf     : VMEM (2, TILE_S, D)       double-buffered gather scratch
    sems    : DMA semaphores (2,)       one per slot (aggregated wait)
    """
    tile_s, d = out_ref.shape
    s = pl.program_id(0)                  # seq tile   (outer, "parallel")
    b = pl.program_id(1)                  # batch row  (inner, "arbitrary")
    nb = pl.num_programs(1)
    seq_pad = pl.num_programs(0) * tile_s
    unroll = tile_s if tile_s <= 32 else 8

    def start_gather(b_idx, slot):
        off = b_idx * seq_pad + s * tile_s      # flattened token offset

        def issue(r, carry):
            row = ids_ref[off + r]
            pltpu.make_async_copy(
                emb_hbm.at[pl.ds(row, 1), :],
                buf.at[slot, pl.ds(r, 1), :],
                sems.at[slot],                  # all rows of a slot: same sem
            ).start()
            return carry

        lax.fori_loop(0, tile_s, issue, 0, unroll=unroll)

    # Prime the double buffer at the start of each seq-tile row.  (Prefetching
    # across outer rows would cross the *parallel* axis, so it is not done.)
    @pl.when(b == 0)
    def _():
        start_gather(0, 0)

    slot = b & 1

    # Prefetch the next batch row of this seq tile before waiting on this one.
    @pl.when(b + 1 < nb)
    def _():
        start_gather(b + 1, (b + 1) & 1)

    # ONE aggregated wait: DMA semaphores count bytes; this descriptor's byte
    # count (TILE_S * D * itemsize) equals the sum of the TILE_S row copies
    # issued on sems[slot].  Only the destination shape and the semaphore
    # matter for the wait — the source here is a same-shape dummy.
    pltpu.make_async_copy(buf.at[1 - slot], buf.at[slot], sems.at[slot]).wait()

    # InputEmbedding: emb(x) * sqrt(d_model); PositionalEncoding: + pe[pos].
    scale = jnp.float32(math.sqrt(d))
    out_ref[...] = (buf[slot].astype(jnp.float32) * scale
                    + pe_ref[...].astype(jnp.float32)).astype(out_ref.dtype)


def _embeddings_vmem_kernel(ids_ref, pe_ref, emb_ref, out_ref):
    """Small-vocab path: whole table VMEM-resident (constant BlockSpec index,
    so it is copied in once); rows are indexed directly — no DMA descriptors."""
    tile_s, d = out_ref.shape
    s = pl.program_id(0)
    b = pl.program_id(1)
    seq_pad = pl.num_programs(0) * tile_s
    off = b * seq_pad + s * tile_s
    scale = jnp.float32(math.sqrt(d))
    unroll = tile_s if tile_s <= 32 else 8

    def body(r, carry):
        row = ids_ref[off + r]
        e = emb_ref[pl.ds(row, 1), :].astype(jnp.float32)
        p = pe_ref[pl.ds(r, 1), :].astype(jnp.float32)
        out_ref[pl.ds(r, 1), :] = (e * scale + p).astype(out_ref.dtype)
        return carry

    lax.fori_loop(0, tile_s, body, 0, unroll=unroll)


# --------------------------------------------------------------------------- #
# Wrapper
# --------------------------------------------------------------------------- #


def make_positional_encoding(seq_len: int, d_model: int) -> jnp.ndarray:
    """Standard 'Attention is all you need' sinusoidal PE table, shape (S, D)."""
    pos = jnp.arange(seq_len, dtype=jnp.float32)[:, None]              # (S, 1)
    i = jnp.arange(0, d_model, 2, dtype=jnp.float32)[None, :]          # (1, D/2)
    div = jnp.exp(-i * (math.log(10000.0) / d_model))                  # (1, D/2)
    angles = pos * div                                                 # (S, D/2)
    pe = jnp.zeros((seq_len, d_model), dtype=jnp.float32)
    pe = pe.at[:, 0::2].set(jnp.sin(angles))
    pe = pe.at[:, 1::2].set(jnp.cos(angles))
    return pe


def _sublane_multiple(dtype) -> int:
    # Second-minor block dims: multiples of 8 for 32-bit, 16 for 16-bit,
    # 32 for 8-bit dtypes (sub-32-bit packs along sublanes).
    return 8 * max(1, 4 // jnp.dtype(dtype).itemsize)


def embeddings_forward(ids: jnp.ndarray,
                       emb_table: jnp.ndarray,
                       pe_table: jnp.ndarray,
                       *,
                       tile_s: int | None = None,
                       force_hbm_gather: bool = False,
                       vmem_table_limit_bytes: int = 4 * 1024 * 1024,
                       vmem_budget_bytes: int = 24 * 1024 * 1024) -> jnp.ndarray:
    """out[b, t] = emb_table[ids[b, t]] * sqrt(D) + pe_table[t]."""
    B, S = ids.shape
    V, D = emb_table.shape
    assert pe_table.shape[0] >= S and pe_table.shape[1] == D
    dtype = emb_table.dtype
    elem = jnp.dtype(dtype).itemsize
    mult = _sublane_multiple(dtype)

    table_bytes = V * D * elem
    use_hbm_gather = force_hbm_gather or table_bytes > vmem_table_limit_bytes

    # Live-VMEM estimate per tile row (pipeline double-buffers every operand):
    #   HBM path : 2x gather scratch + 2x PE + 2x out   -> 6 * D * elem / row
    #   VMEM path: 2x table (fixed)  + 2x PE + 2x out   -> 4 * D * elem / row
    bytes_per_row = (6 if use_hbm_gather else 4) * D * elem
    fixed_bytes = 0 if use_hbm_gather else 2 * table_bytes
    if tile_s is None:
        cap = max(vmem_budget_bytes - fixed_bytes, 0) // bytes_per_row
        cap = max(mult, (cap // mult) * mult)
        cap = min(cap, 512)                 # amortizes the ~0.35 us/step cost
        tile_s = min(cap, pl.cdiv(S, mult) * mult)
    assert tile_s % mult == 0, "seq tile must be a multiple of the sublane pack"

    ns_tiles = pl.cdiv(S, tile_s)
    S_pad = ns_tiles * tile_s               # pad so (8,128) tiling always holds

    est_vmem = fixed_bytes + bytes_per_row * tile_s + (1 << 20)
    vmem_limit_bytes = int(min(max(32 << 20, est_vmem), 48 << 20))

    # TODO(synk): nn.Embedding raises on out-of-range ids; here they are clamped
    # so a bad id can never become an out-of-bounds HBM DMA.
    ids_pad = jnp.clip(ids, 0, V - 1).astype(jnp.int32)
    pe = pe_table[:S].astype(dtype)
    if S_pad != S:
        ids_pad = jnp.pad(ids_pad, ((0, 0), (0, S_pad - S)))
        pe = jnp.pad(pe, ((0, S_pad - S), (0, 0)))
    ids_flat = ids_pad.reshape(-1)

    # Grid: seq tile outer ("parallel"), batch inner ("arbitrary").  The PE
    # block index depends only on s, so it is NOT re-fetched across the inner
    # batch steps.  Output is emitted lane-dense as (B*S_pad, D).
    pe_spec = pl.BlockSpec((tile_s, D), lambda s, b, ids: (s, 0))
    out_spec = pl.BlockSpec((tile_s, D), lambda s, b, ids: (b * ns_tiles + s, 0))

    if use_hbm_gather:
        kernel = _embeddings_gather_kernel
        emb_spec = pl.BlockSpec(memory_space=pl.ANY)        # table stays in HBM
        scratch = [pltpu.VMEM((2, tile_s, D), dtype),       # gather double buffer
                   pltpu.SemaphoreType.DMA((2,))]           # one sem per slot
    else:
        kernel = _embeddings_vmem_kernel
        emb_spec = pl.BlockSpec((V, D), lambda s, b, ids: (0, 0))   # resident
        scratch = []

    grid_spec = pltpu.PrefetchScalarGridSpec(
        num_scalar_prefetch=1,                               # ids -> SMEM
        grid=(ns_tiles, B),
        in_specs=[pe_spec, emb_spec],
        out_specs=out_spec,
        scratch_shapes=scratch,
    )

    out_flat = pl.pallas_call(
        kernel,
        out_shape=jax.ShapeDtypeStruct((B * S_pad, D), dtype),
        grid_spec=grid_spec,
        compiler_params=pltpu.CompilerParams(
            dimension_semantics=("parallel", "arbitrary"),
            vmem_limit_bytes=vmem_limit_bytes),
    )(ids_flat, pe, emb_table)

    out = out_flat.reshape(B, S_pad, D)
    return out[:, :S, :] if S_pad != S else out


# --------------------------------------------------------------------------- #
# Demo / correctness check
# --------------------------------------------------------------------------- #


if __name__ == "__main__":
    # Small, deterministic example shapes (lane-dense d_model = 128).
    B, S = 2, 8            # batch, sequence length
    V, D = 32, 128         # vocab size, d_model

    key = jax.random.PRNGKey(0)
    k_ids, k_emb = jax.random.split(key)

    ids = jax.random.randint(k_ids, (B, S), 0, V, dtype=jnp.int32)
    emb_table = jax.random.normal(k_emb, (V, D), dtype=jnp.float32)
    pe_table = make_positional_encoding(S, D)

    # Pure-JAX reference (same semantics as the PyTorch forward).
    ref = (jnp.take(emb_table, ids, axis=0) * jnp.float32(math.sqrt(D))
           + pe_table[None, :, :])

    # Small-vocab path (default dispatch): table VMEM-resident, direct indexing.
    out_vmem = jax.block_until_ready(embeddings_forward(ids, emb_table, pe_table))
    # Large-vocab path (forced here so it is exercised too): HBM table +
    # double-buffered DMA row gather with the aggregated wait.
    out_hbm = jax.block_until_ready(
        embeddings_forward(ids, emb_table, pe_table, force_hbm_gather=True))

    assert out_vmem.shape == (B, S, D) and out_hbm.shape == (B, S, D)
    assert jnp.allclose(out_vmem, ref, atol=1e-5, rtol=1e-5)
    assert jnp.allclose(out_hbm, ref, atol=1e-5, rtol=1e-5)

    print("KERNEL_OK")
</pallas_src>

<mosaic_0001>
module attributes {stable_mosaic.version = 11 : i64} {
  func.func @_embeddings_vmem_kernel(%arg0: i32, %arg1: i32, %arg2: memref<16xi32, #tpu.memory_space<smem>>, %arg3: memref<8x128xf32, #tpu.memory_space<vmem>>, %arg4: memref<32x128xf32, #tpu.memory_space<vmem>>, %arg5: memref<8x128xf32, #tpu.memory_space<vmem>>) attributes {dimension_semantics = [#tpu.dimension_semantics<parallel>, #tpu.dimension_semantics<arbitrary>], iteration_bounds = array<i64: 1, 2>, scalar_prefetch = 1 : i64, scratch_operands = 0 : i64, tpu.core_type = #tpu.core_type<tc>, window_params = [{transform_indices = @transform_0, window_bounds = array<i64: 8, 128>}, {pipeline_mode = #tpu.pipeline_mode<synchronous>, transform_indices = @transform_1, window_bounds = array<i64: 32, 128>}, {transform_indices = @transform_2, window_bounds = array<i64: 8, 128>}]} {
    %c8_i32 = arith.constant 8 : i32
    %0 = arith.muli %arg1, %c8_i32 : i32
    %c8_i32_0 = arith.constant 8 : i32
    %1 = arith.muli %arg0, %c8_i32_0 : i32
    %2 = arith.addi %0, %1 : i32
    %cst = arith.constant 11.3137083 : f32
    %c0_i32 = arith.constant 0 : i32
    %3 = arith.addi %2, %c0_i32 : i32
    %4 = arith.index_cast %3 : i32 to index
    %5 = memref.load %arg2[%4] : memref<16xi32, #tpu.memory_space<smem>>
    %6 = arith.index_cast %5 : i32 to index
    %c0 = arith.constant 0 : index
    %7 = vector.load %arg4[%6, %c0] : memref<32x128xf32, #tpu.memory_space<vmem>>, vector<1x128xf32>
    %8 = arith.index_cast %c0_i32 : i32 to index
    %c0_1 = arith.constant 0 : index
    %9 = vector.load %arg3[%8, %c0_1] : memref<8x128xf32, #tpu.memory_space<vmem>>, vector<1x128xf32>
    %10 = vector.broadcast %cst : f32 to vector<1x128xf32>
    %11 = arith.mulf %7, %10 : vector<1x128xf32>
    %12 = arith.addf %11, %9 : vector<1x128xf32>
    %13 = arith.index_cast %c0_i32 : i32 to index
    %c0_2 = arith.constant 0 : index
    %14 = vector.load %arg5[%13, %c0_2] : memref<8x128xf32, #tpu.memory_space<vmem>>, vector<1x128xf32>
    tpu.vector_store %arg5[%13, %c0_2], %12 {strides = array<i32>} : memref<8x128xf32, #tpu.memory_space<vmem>>, vector<1x128xf32>,
    %c1_i32 = arith.constant 1 : i32
    %15 = arith.addi %2, %c1_i32 : i32
    %16 = arith.index_cast %15 : i32 to index
    %17 = memref.load %arg2[%16] : memref<16xi32, #tpu.memory_space<smem>>
    %18 = arith.index_cast %17 : i32 to index
    %c0_3 = arith.constant 0 : index
    %19 = vector.load %arg4[%18, %c0_3] : memref<32x128xf32, #tpu.memory_space<vmem>>, vector<1x128xf32>
    %20 = arith.index_cast %c1_i32 : i32 to index
    %c0_4 = arith.constant 0 : index
    %21 = vector.load %arg3[%20, %c0_4] : memref<8x128xf32, #tpu.memory_space<vmem>>, vector<1x128xf32>
    %22 = vector.broadcast %cst : f32 to vector<1x128xf32>
    %23 = arith.mulf %19, %22 : vector<1x128xf32>
    %24 = arith.addf %23, %21 : vector<1x128xf32>
    %25 = arith.index_cast %c1_i32 : i32 to index
    %c0_5 = arith.constant 0 : index
    %26 = vector.load %arg5[%25, %c0_5] : memref<8x128xf32, #tpu.memory_space<vmem>>, vector<1x128xf32>
    tpu.vector_store %arg5[%25, %c0_5], %24 {strides = array<i32>} : memref<8x128xf32, #tpu.memory_space<vmem>>, vector<1x128xf32>,
    %c2_i32 = arith.constant 2 : i32
    %27 = arith.addi %2, %c2_i32 : i32
    %28 = arith.index_cast %27 : i32 to index
    %29 = memref.load %arg2[%28] : memref<16xi32, #tpu.memory_space<smem>>
    %30 = arith.index_cast %29 : i32 to index
    %c0_6 = arith.constant 0 : index
    %31 = vector.load %arg4[%30, %c0_6] : memref<32x128xf32, #tpu.memory_space<vmem>>, vector<1x128xf32>
    %32 = arith.index_cast %c2_i32 : i32 to index
    %c0_7 = arith.constant 0 : index
    %33 = vector.load %arg3[%32, %c0_7] : memref<8x128xf32, #tpu.memory_space<vmem>>, vector<1x128xf32>
    %34 = vector.broadcast %cst : f32 to vector<1x128xf32>
    %35 = arith.mulf %31, %34 : vector<1x128xf32>
    %36 = arith.addf %35, %33 : vector<1x128xf32>
    %37 = arith.index_cast %c2_i32 : i32 to index
    %c0_8 = arith.constant 0 : index
    %38 = vector.load %arg5[%37, %c0_8] : memref<8x128xf32, #tpu.memory_space<vmem>>, vector<1x128xf32>
    tpu.vector_store %arg5[%37, %c0_8], %36 {strides = array<i32>} : memref<8x128xf32, #tpu.memory_space<vmem>>, vector<1x128xf32>,
    %c3_i32 = arith.constant 3 : i32
    %39 = arith.addi %2, %c3_i32 : i32
    %40 = arith.index_cast %39 : i32 to index
    %41 = memref.load %arg2[%40] : memref<16xi32, #tpu.memory_space<smem>>
    %42 = arith.index_cast %41 : i32 to index
    %c0_9 = arith.constant 0 : index
    %43 = vector.load %arg4[%42, %c0_9] : memref<32x128xf32, #tpu.memory_space<vmem>>, vector<1x128xf32>
    %44 = arith.index_cast %c3_i32 : i32 to index
    %c0_10 = arith.constant 0 : index
    %45 = vector.load %arg3[%44, %c0_10] : memref<8x128xf32, #tpu.memory_space<vmem>>, vector<1x128xf32>
    %46 = vector.broadcast %cst : f32 to vector<1x128xf32>
    %47 = arith.mulf %43, %46 : vector<1x128xf32>
    %48 = arith.addf %47, %45 : vector<1x128xf32>
    %49 = arith.index_cast %c3_i32 : i32 to index
    %c0_11 = arith.constant 0 : index
    %50 = vector.load %arg5[%49, %c0_11] : memref<8x128xf32, #tpu.memory_space<vmem>>, vector<1x128xf32>
    tpu.vector_store %arg5[%49, %c0_11], %48 {strides = array<i32>} : memref<8x128xf32, #tpu.memory_space<vmem>>, vector<1x128xf32>,
    %c4_i32 = arith.constant 4 : i32
    %51 = arith.addi %2, %c4_i32 : i32
    %52 = arith.index_cast %51 : i32 to index
    %53 = memref.load %arg2[%52] : memref<16xi32, #tpu.memory_space<smem>>
    %54 = arith.index_cast %53 : i32 to index
    %c0_12 = arith.constant 0 : index
    %55 = vector.load %arg4[%54, %c0_12] : memref<32x128xf32, #tpu.memory_space<vmem>>, vector<1x128xf32>
    %56 = arith.index_cast %c4_i32 : i32 to index
    %c0_13 = arith.constant 0 : index
    %57 = vector.load %arg3[%56, %c0_13] : memref<8x128xf32, #tpu.memory_space<vmem>>, vector<1x128xf32>
    %58 = vector.broadcast %cst : f32 to vector<1x128xf32>
    %59 = arith.mulf %55, %58 : vector<1x128xf32>
    %60 = arith.addf %59, %57 : vector<1x128xf32>
    %61 = arith.index_cast %c4_i32 : i32 to index
    %c0_14 = arith.constant 0 : index
    %62 = vector.load %arg5[%61, %c0_14] : memref<8x128xf32, #tpu.memory_space<vmem>>, vector<1x128xf32>
    tpu.vector_store %arg5[%61, %c0_14], %60 {strides = array<i32>} : memref<8x128xf32, #tpu.memory_space<vmem>>, vector<1x128xf32>,
    %c5_i32 = arith.constant 5 : i32
    %63 = arith.addi %2, %c5_i32 : i32
    %64 = arith.index_cast %63 : i32 to index
    %65 = memref.load %arg2[%64] : memref<16xi32, #tpu.memory_space<smem>>
    %66 = arith.index_cast %65 : i32 to index
    %c0_15 = arith.constant 0 : index
    %67 = vector.load %arg4[%66, %c0_15] : memref<32x128xf32, #tpu.memory_space<vmem>>, vector<1x128xf32>
    %68 = arith.index_cast %c5_i32 : i32 to index
    %c0_16 = arith.constant 0 : index
    %69 = vector.load %arg3[%68, %c0_16] : memref<8x128xf32, #tpu.memory_space<vmem>>, vector<1x128xf32>
    %70 = vector.broadcast %cst : f32 to vector<1x128xf32>
    %71 = arith.mulf %67, %70 : vector<1x128xf32>
    %72 = arith.addf %71, %69 : vector<1x128xf32>
    %73 = arith.index_cast %c5_i32 : i32 to index
    %c0_17 = arith.constant 0 : index
    %74 = vector.load %arg5[%73, %c0_17] : memref<8x128xf32, #tpu.memory_space<vmem>>, vector<1x128xf32>
    tpu.vector_store %arg5[%73, %c0_17], %72 {strides = array<i32>} : memref<8x128xf32, #tpu.memory_space<vmem>>, vector<1x128xf32>,
    %c6_i32 = arith.constant 6 : i32
    %75 = arith.addi %2, %c6_i32 : i32
    %76 = arith.index_cast %75 : i32 to index
    %77 = memref.load %arg2[%76] : memref<16xi32, #tpu.memory_space<smem>>
    %78 = arith.index_cast %77 : i32 to index
    %c0_18 = arith.constant 0 : index
    %79 = vector.load %arg4[%78, %c0_18] : memref<32x128xf32, #tpu.memory_space<vmem>>, vector<1x128xf32>
    %80 = arith.index_cast %c6_i32 : i32 to index
    %c0_19 = arith.constant 0 : index
    %81 = vector.load %arg3[%80, %c0_19] : memref<8x128xf32, #tpu.memory_space<vmem>>, vector<1x128xf32>
    %82 = vector.broadcast %cst : f32 to vector<1x128xf32>
    %83 = arith.mulf %79, %82 : vector<1x128xf32>
    %84 = arith.addf %83, %81 : vector<1x128xf32>
    %85 = arith.index_cast %c6_i32 : i32 to index
    %c0_20 = arith.constant 0 : index
    %86 = vector.load %arg5[%85, %c0_20] : memref<8x128xf32, #tpu.memory_space<vmem>>, vector<1x128xf32>
    tpu.vector_store %arg5[%85, %c0_20], %84 {strides = array<i32>} : memref<8x128xf32, #tpu.memory_space<vmem>>, vector<1x128xf32>,
    %c7_i32 = arith.constant 7 : i32
    %87 = arith.addi %2, %c7_i32 : i32
    %88 = arith.index_cast %87 : i32 to index
    %89 = memref.load %arg2[%88] : memref<16xi32, #tpu.memory_space<smem>>
    %90 = arith.index_cast %89 : i32 to index
    %c0_21 = arith.constant 0 : index
    %91 = vector.load %arg4[%90, %c0_21] : memref<32x128xf32, #tpu.memory_space<vmem>>, vector<1x128xf32>
    %92 = arith.index_cast %c7_i32 : i32 to index
    %c0_22 = arith.constant 0 : index
    %93 = vector.load %arg3[%92, %c0_22] : memref<8x128xf32, #tpu.memory_space<vmem>>, vector<1x128xf32>
    %94 = vector.broadcast %cst : f32 to vector<1x128xf32>
    %95 = arith.mulf %91, %94 : vector<1x128xf32>
    %96 = arith.addf %95, %93 : vector<1x128xf32>
    %97 = arith.index_cast %c7_i32 : i32 to index
    %c0_23 = arith.constant 0 : index
    %98 = vector.load %arg5[%97, %c0_23] : memref<8x128xf32, #tpu.memory_space<vmem>>, vector<1x128xf32>
    tpu.vector_store %arg5[%97, %c0_23], %96 {strides = array<i32>} : memref<8x128xf32, #tpu.memory_space<vmem>>, vector<1x128xf32>,
    %c8_i32_24 = arith.constant 8 : i32
    return
  }
  func.func @transform_0(%arg0: i32, %arg1: i32, %arg2: memref<16xi32, #tpu.memory_space<smem>>) -> (i32, i32) {
    %c0_i32 = arith.constant 0 : i32
    %c0_i32_0 = arith.constant 0 : i32
    return %arg0, %c0_i32 : i32, i32
  }
  func.func @transform_1(%arg0: i32, %arg1: i32, %arg2: memref<16xi32, #tpu.memory_space<smem>>) -> (i32, i32) {
    %c0_i32 = arith.constant 0 : i32
    %c0_i32_0 = arith.constant 0 : i32
    %c0_i32_1 = arith.constant 0 : i32
    return %c0_i32, %c0_i32_0 : i32, i32
  }
  func.func @transform_2(%arg0: i32, %arg1: i32, %arg2: memref<16xi32, #tpu.memory_space<smem>>) -> (i32, i32) {
    %c1_i32 = arith.constant 1 : i32
    %0 = arith.muli %arg1, %c1_i32 : i32
    %1 = arith.addi %0, %arg0 : i32
    %c0_i32 = arith.constant 0 : i32
    %c0_i32_0 = arith.constant 0 : i32
    return %1, %c0_i32 : i32, i32
  }
}

</mosaic_0001>

<llo_original>
// kernel: tpu_custom_call.1
$region0: #{tpu_custom_call.1}
  #allocation0 [shape = 'u32[]', space=smem, size = 0x4, offset = 0x4, fixed_abs, tag = 'smem constant byte address 0x4 - core index']
  #allocation1 [shape = 'u32[72,128]{1,0:T(1,128)}', space=vmem, size = 0x9000, scoped, tag = 'internal scratch']
  #allocation2 [shape = 's32[1]{0}', space=sflag, size = 0x4, scoped, tag = 'scoped memory for tpu_custom_call.1']
  #allocation3 [shape = 'u8[512]{0}', space=smem, size = 0x200, scoped, tag = 'prefetched SMEM operand 0']
  %s0 = inlined_call_operand.hbm [shape: s32[16], index: 0, kind: input, shape index: {}]
  %s1 = inlined_call_operand.hbm [shape: f32[8,128], index: 1, kind: input, shape index: {}]
  %s2 = inlined_call_operand.hbm [shape: f32[32,128], index: 2, kind: input, shape index: {}]
  %s3 = inlined_call_operand.hbm [shape: f32[16,128], index: 3, kind: output, shape index: {}]
  %s4 = sld [smem:[#allocation0]]
  $region49: #{tpu_custom_call.1} parent=0
    _
  %s6 = ssub.s32 1, %s4
  %s7 = scalar_select 0, %s6, %s4
  %s9 = sshll.u32 %s0, 4
  %s10 = int_to_ptr.hbm [resolvable:$true] %s9
  %12 = dma.hbm_to_smem %s10, 16, [#allocation3], [#allocation2]
  %14 = dma.done [#allocation2], 16
  %15 = sfence
  $region1: #{tpu_custom_call.1} parent=0
    #allocation4 [shape = 'u8[4096]{0}', space=vmem, size = 0x1000, scoped, tag = 'input window, operand 1, single buffered']
    #allocation5 [shape = 's32[2]{0}', space=sflag, size = 0x8, scoped, tag = 'scoped memory for tpu_custom_call.1']
    #allocation6 [shape = 's32[2]{0}', space=sflag, size = 0x8, scoped, tag = 'scoped memory for tpu_custom_call.1']
    #allocation7 [shape = 'u8[16384]{0}', space=vmem, size = 0x4000, scoped, tag = 'input window, operand 2, single buffered']
    #allocation8 [shape = 's32[1]{0}', space=sflag, size = 0x4, scoped, tag = 'scoped memory for tpu_custom_call.1']
    #allocation9 [shape = 'u8[8192]{0}', space=vmem, size = 0x2000, scoped, tag = 'output window, operand 0']
    %16 = vsyncpa [#allocation5], 0
    %17 = vsyncpa [#allocation8], 0
    %18 = vsyncpa [#allocation6], 0
    %s19 = scalar_lea.sflag [#allocation6], 1
    %20 = vsyncpa %s19, 0
    loop: start=0, step=1, limit=4
    $region2: #{tpu_custom_call.1} parent=1 // loop_pre_header
      _
    $region3: #{tpu_custom_call.1} parent=1 // loop_header
      %s22 = sphi 0, %s26
      %p23 = scmp.ge.s32.totalorder %s22, 4
      %s29 = sphi 0, %s41
      %s30 = sphi 0, %s37
      %s31 = sphi 0, %s29
      %s32 = sphi 0, %s30
      %s33 = sphi 0, %s31
      %s34 = sphi 0, %s32
      %s44 = sphi 0, %s46
      %s47 = sphi 0, %s44
      %s48 = sphi 0, %s47
      %s64 = sphi 0, %s48
      %s68 = sphi 0, %s68
      %s70 = sphi 0, %s68
      %s71 = sphi 0, %s70
      %s85 = sphi 0, %s71
      %s93 = sphi 0, %s95
      %s96 = sphi 0, %s93
      %s97 = sphi 0, %s96
      %s113 = sphi 0, %s97
    $region4: #{tpu_custom_call.1} parent=1 // loop_header_branch
      %25 = sbr.rel (%p23) target = $region8
    $region5: #{tpu_custom_call.1} parent=1 // loop_body
      %s27 = ssub.s32 %s22, 1
      %s28 = ssub.s32 %s22, 2
      %s35 = sadd.s32 1, %s30
      %p36 = scmp.ge.s32.totalorder %s35, 2
      %s37 = scalar_select %p36, 0, %s35
      %s38 = sadd.s32 1, %s29
      %s39 = scalar_select %p36, %s38, %s29
      %p40 = scmp.ge.s32.totalorder %s39, 1
      %s41 = scalar_select %p40, 0, %s39
      %s42 = ssub.s32 %s29, %s41
      %p43 = scmp.eq.s32.totalorder %s42, 0
      %s45 = sadd.s32 %s44, 1
      %s46 = scalar_select %p43, %s44, %s45
      %p49 = pneg %p43
      %p50 = scmp.eq.s32.totalorder %s22, 1
      %p51 = por %p49, %p50
      %p52 = scmp.ne.s32.totalorder %s44, %s47
      %p53 = scmp.eq.s32.totalorder %s22, 0
      %p54 = por %p52, %p53
      %p55 = scmp.ne.s32.totalorder %s44, %s47
      %p56 = scmp.eq.s32.totalorder %s27, 1
      %p57 = por %p55, %p56
      %p58 = scmp.ne.s32.totalorder %s47, %s48
      %p59 = scmp.eq.s32.totalorder %s27, 0
      %p60 = por %p58, %p59
      %p61 = scmp.ne.s32.totalorder %s47, %s48
      %p62 = scmp.eq.s32.totalorder %s28, 1
      %p63 = por %p61, %p62
      %p65 = scmp.ne.s32.totalorder %s48, %s64
      %p66 = scmp.eq.s32.totalorder %s28, 0
      %p67 = por %p65, %p66
      %s69 = sadd.s32 %s68, 1
      %p72 = scmp.eq.s32.totalorder %s22, 1
      %p73 = scmp.ne.s32.totalorder %s68, %s70
      %p74 = scmp.eq.s32.totalorder %s22, 0
      %p75 = por %p73, %p74
      %p76 = scmp.ne.s32.totalorder %s68, %s70
      %p77 = scmp.eq.s32.totalorder %s27, 1
      %p78 = por %p76, %p77
      %p79 = scmp.ne.s32.totalorder %s70, %s71
      %p80 = scmp.eq.s32.totalorder %s27, 0
      %p81 = por %p79, %p80
      %p82 = scmp.ne.s32.totalorder %s70, %s71
      %p83 = scmp.eq.s32.totalorder %s28, 1
      %p84 = por %p82, %p83
      %p86 = scmp.ne.s32.totalorder %s71, %s85
      %p87 = scmp.eq.s32.totalorder %s28, 0
      %p88 = por %p86, %p87
      %s89 = sadd.s32 %s30, %s29
      %s90 = sadd.s32 %s37, %s41
      %s91 = ssub.s32 %s89, %s90
      %p92 = scmp.eq.s32.totalorder %s91, 0
      %s94 = sadd.s32 %s93, 1
      %s95 = scalar_select %p92, %s93, %s94
      %p98 = pneg %p92
      %p99 = scmp.eq.s32.totalorder %s22, 1
      %p100 = por %p98, %p99
      %p101 = scmp.ne.s32.totalorder %s93, %s96
      %p102 = scmp.eq.s32.totalorder %s22, 0
      %p103 = por %p101, %p102
      %p104 = scmp.ne.s32.totalorder %s93, %s96
      %p105 = scmp.eq.s32.totalorder %s27, 1
      %p106 = por %p104, %p105
      %p107 = scmp.ne.s32.totalorder %s96, %s97
      %p108 = scmp.eq.s32.totalorder %s27, 0
      %p109 = por %p107, %p108
      %p110 = scmp.ne.s32.totalorder %s96, %s97
      %p111 = scmp.eq.s32.totalorder %s28, 1
      %p112 = por %p110, %p111
      %p114 = scmp.ne.s32.totalorder %s97, %s113
      %p115 = scmp.eq.s32.totalorder %s28, 0
      %p116 = por %p114, %p115
      %p117 = scmp.le.s32.totalorder 1, %s22
      %p118 = scmp.lt.s32.totalorder %s22, 3
      %p119 = pnand %p117, %p118
      %p120 = pneg %p119
      // Predicated region
      $region9: #{tpu_custom_call.1} parent=5 // pred_check
        _
      $region10: #{tpu_custom_call.1} parent=5 // pred_check_branch
        %122 = sbr.rel (%p119) target = $region12
      $region11: #{tpu_custom_call.1} parent=5 // pred_region
        %s123 = ssub.s32 %s22, 1
        // Predicated region
        $region13: #{tpu_custom_call.1} parent=11 // pred_check
          %p124 = pneg %p60
        $region14: #{tpu_custom_call.1} parent=11 // pred_check_branch
          %126 = sbr.rel (%p124) target = $region16
        $region15: #{tpu_custom_call.1} parent=11 // pred_region
          %128 = vsyncadd [#allocation5], 0
          %s129 = smul.addr %s31, 8
          %s130 = scalar_lea.hbm %s1, %s129
          %s132 = sshll.u32 %s130, 4
          %s133 = int_to_ptr.hbm [resolvable:$true] %s132
          %s134 = sshll.u32 [#allocation4], 4
          %s135 = int_to_ptr.vmem [resolvable:$true] %s134
          %137 = dma.hbm_to_vmem [thread:$0]  %s133, 128, %s135, [#allocation5]
        $region16: #{tpu_custom_call.1} parent=11 // pred_fallthru
          _
        // Predicated region
        $region17: #{tpu_custom_call.1} parent=11 // pred_check
          %p138 = pneg %p81
        $region18: #{tpu_custom_call.1} parent=11 // pred_check_branch
          %140 = sbr.rel (%p138) target = $region20
        $region19: #{tpu_custom_call.1} parent=11 // pred_region
          %142 = vsyncadd [#allocation8], 0
          %s143 = sshll.u32 %s2, 4
          %s144 = int_to_ptr.hbm [resolvable:$true] %s143
          %s145 = sshll.u32 [#allocation7], 4
          %s146 = int_to_ptr.vmem [resolvable:$true] %s145
          %151 = dma.hbm_to_vmem [thread:$0]  %s144, 512, %s146, [#allocation8], 128, 128, 8
        $region20: #{tpu_custom_call.1} parent=11 // pred_fallthru
          _
      $region12: #{tpu_custom_call.1} parent=5 // pred_fallthru
        _
      %p152 = scmp.lt.s32.totalorder %s22, 2
      // Predicated region
      $region21: #{tpu_custom_call.1} parent=5 // pred_check
        %p153 = pneg %p152
      $region22: #{tpu_custom_call.1} parent=5 // pred_check_branch
        %155 = sbr.rel (%p153) target = $region24
      $region23: #{tpu_custom_call.1} parent=5 // pred_region
        _
      $region24: #{tpu_custom_call.1} parent=5 // pred_fallthru
        _
      %p156 = scmp.le.s32.totalorder 1, %s22
      %p157 = scmp.lt.s32.totalorder %s22, 3
      %p158 = pnand %p156, %p157
      %p159 = pneg %p158
      // Predicated region
      $region25: #{tpu_custom_call.1} parent=5 // pred_check
        _
      $region26: #{tpu_custom_call.1} parent=5 // pred_check_branch
        %161 = sbr.rel (%p158) target = $region28
      $region27: #{tpu_custom_call.1} parent=5 // pred_region
        %s162 = ssub.s32 %s22, 1
        // Predicated region
        $region29: #{tpu_custom_call.1} parent=27 // pred_check
          %p163 = pneg %p60
        $region30: #{tpu_custom_call.1} parent=27 // pred_check_branch
          %165 = sbr.rel (%p163) target = $region32
        $region31: #{tpu_custom_call.1} parent=27 // pred_region
          %167 = dma.done [#allocation5], 128
        $region32: #{tpu_custom_call.1} parent=27 // pred_fallthru
          _
        // Predicated region
        $region33: #{tpu_custom_call.1} parent=27 // pred_check
          %p168 = pneg %p81
        $region34: #{tpu_custom_call.1} parent=27 // pred_check_branch
          %170 = sbr.rel (%p168) target = $region36
        $region35: #{tpu_custom_call.1} parent=27 // pred_region
          %172 = dma.done [#allocation8], 512
        $region36: #{tpu_custom_call.1} parent=27 // pred_fallthru
          _
        %p173 = pneg %p60
        %p174 = pneg %p57
        %p175 = pneg %p81
        %p176 = pneg %p78
        %p177 = pneg %p109
        %p178 = pneg %p106
        %s179 = sand.u32 %s96, 1
        %s180 = scalar_lea.sflag [#allocation6], %s179
        %s181 = sand.u32 %s96, 1
        %s182 = smul.addr %s181, 8
        %s183 = scalar_lea.vmem [#allocation9], %s182
        %s184 = sadd.s32 %s32, %s31
        %s185 = smul.u32 %s32, 8
        %s186 = smul.u32 %s31, 8
        %s187 = sadd.s32 %s185, %s186
        %s188 = sld [smem:[#allocation3 + %s187]]
        %s189 = scalar_lea.vmem [#allocation7], %s188
        %v190 = vld [vmem:[%s189] sm:$0x1]
        %v191 = vld [vmem:[#allocation4] sm:$0x1]
        %v192 = vmul.f32 %v190, 11.313708
        %v193 = vadd.f32 %v192, %v191
        %194 = vst [vmem:[%s183] sm:$0x1] %v193
        %s195 = sadd.s32 %s187, 1
        %s196 = sld [smem:[#allocation3 + %s195]]
        %s197 = scalar_lea.vmem [#allocation7], %s196
        %v198 = vld [vmem:[%s197] sm:$0x1]
        %v199 = vld [vmem:[#allocation4 + $0x1] sm:$0x1]
        %v200 = vmul.f32 %v198, 11.313708
        %v201 = vadd.f32 %v200, %v199
        %202 = vst [vmem:[%s183 + $0x1] sm:$0x1] %v201
        %s203 = sadd.s32 %s187, 2
        %s204 = sld [smem:[#allocation3 + %s203]]
        %s205 = scalar_lea.vmem [#allocation7], %s204
        %v206 = vld [vmem:[%s205] sm:$0x1]
        %v207 = vld [vmem:[#allocation4 + $0x2] sm:$0x1]
        %v208 = vmul.f32 %v206, 11.313708
        %v209 = vadd.f32 %v208, %v207
        %210 = vst [vmem:[%s183 + $0x2] sm:$0x1] %v209
        %s211 = sadd.s32 %s187, 3
        %s212 = sld [smem:[#allocation3 + %s211]]
        %s213 = scalar_lea.vmem [#allocation7], %s212
        %v214 = vld [vmem:[%s213] sm:$0x1]
        %v215 = vld [vmem:[#allocation4 + $0x3] sm:$0x1]
        %v216 = vmul.f32 %v214, 11.313708
        %v217 = vadd.f32 %v216, %v215
        %218 = vst [vmem:[%s183 + $0x3] sm:$0x1] %v217
        %s219 = sadd.s32 %s187, 4
        %s220 = sld [smem:[#allocation3 + %s219]]
        %s221 = scalar_lea.vmem [#allocation7], %s220
        %v222 = vld [vmem:[%s221] sm:$0x1]
        %v223 = vld [vmem:[#allocation4 + $0x4] sm:$0x1]
        %v224 = vmul.f32 %v222, 11.313708
        %v225 = vadd.f32 %v224, %v223
        %226 = vst [vmem:[%s183 + $0x4] sm:$0x1] %v225
        %s227 = sadd.s32 %s187, 5
        %s228 = sld [smem:[#allocation3 + %s227]]
        %s229 = scalar_lea.vmem [#allocation7], %s228
        %v230 = vld [vmem:[%s229] sm:$0x1]
        %v231 = vld [vmem:[#allocation4 + $0x5] sm:$0x1]
        %v232 = vmul.f32 %v230, 11.313708
        %v233 = vadd.f32 %v232, %v231
        %234 = vst [vmem:[%s183 + $0x5] sm:$0x1] %v233
        %s235 = sadd.s32 %s187, 6
        %s236 = sld [smem:[#allocation3 + %s235]]
        %s237 = scalar_lea.vmem [#allocation7], %s236
        %v238 = vld [vmem:[%s237] sm:$0x1]
        %v239 = vld [vmem:[#allocation4 + $0x6] sm:$0x1]
        %v240 = vmul.f32 %v238, 11.313708
        %v241 = vadd.f32 %v240, %v239
        %242 = vst [vmem:[%s183 + $0x6] sm:$0x1] %v241
        %s243 = sadd.s32 %s187, 7
        %s244 = sld [smem:[#allocation3 + %s243]]
        %s245 = scalar_lea.vmem [#allocation7], %s244
        %v246 = vld [vmem:[%s245] sm:$0x1]
        %v247 = vld [vmem:[#allocation4 + $0x7] sm:$0x1]
        %v248 = vmul.f32 %v246, 11.313708
        %v249 = vadd.f32 %v248, %v247
        %250 = vst [vmem:[%s183 + $0x7] sm:$0x1] %v249
        %s251 = sand.u32 %s96, 1
        %s252 = scalar_lea.sflag [#allocation6], %s251
        %s253 = sand.u32 %s96, 1
        %s254 = smul.addr %s253, 8
        %s255 = scalar_lea.vmem [#allocation9], %s254
        // Predicated region
        $region37: #{tpu_custom_call.1} parent=27 // pred_check
          %p256 = pneg %p106
        $region38: #{tpu_custom_call.1} parent=27 // pred_check_branch
          %258 = sbr.rel (%p256) target = $region40
        $region39: #{tpu_custom_call.1} parent=27 // pred_region
          %s259 = sadd.s32 %s32, %s31
          %261 = vsyncadd %s252, 0
          %s262 = smul.addr %s259, 8
          %s263 = scalar_lea.hbm %s3, %s262
          %s265 = sshll.u32 %s255, 4
          %s266 = int_to_ptr.vmem [resolvable:$true] %s265
          %s267 = sshll.u32 %s263, 4
          %s268 = int_to_ptr.hbm [resolvable:$true] %s267
          %270 = dma.vmem_to_hbm [thread:$0]  %s266, 128, %s268, %s252
        $region40: #{tpu_custom_call.1} parent=27 // pred_fallthru
          _
      $region28: #{tpu_custom_call.1} parent=5 // pred_fallthru
        _
      %p271 = scmp.le.s32.totalorder 2, %s22
      // Predicated region
      $region41: #{tpu_custom_call.1} parent=5 // pred_check
        %p272 = pneg %p271
      $region42: #{tpu_custom_call.1} parent=5 // pred_check_branch
        %274 = sbr.rel (%p272) target = $region44
      $region43: #{tpu_custom_call.1} parent=5 // pred_region
        %s275 = ssub.s32 %s22, 2
        // Predicated region
        $region45: #{tpu_custom_call.1} parent=43 // pred_check
          %p276 = pneg %p112
        $region46: #{tpu_custom_call.1} parent=43 // pred_check_branch
          %278 = sbr.rel (%p276) target = $region48
        $region47: #{tpu_custom_call.1} parent=43 // pred_region
          %s279 = sand.u32 %s97, 1
          %s280 = scalar_lea.sflag [#allocation6], %s279
          %s281 = sand.u32 %s97, 1
          %s282 = smul.addr %s281, 8
          %s283 = scalar_lea.vmem [#allocation9], %s282
          %285 = dma.done %s280, 128
        $region48: #{tpu_custom_call.1} parent=43 // pred_fallthru
          _
      $region44: #{tpu_custom_call.1} parent=5 // pred_fallthru
        _
    $region6: #{tpu_custom_call.1} parent=1 // loop_footer
      %s26 = sadd.s32 1, %s22
    $region7: #{tpu_custom_call.1} parent=1 // loop_footer_branch
      %21 = sbr.rel target = $region3
    $region8: #{tpu_custom_call.1} parent=1 // loop_exit
      _
    %286 = vsyncpa [#allocation5], 1
    %s287 = scalar_lea.sflag [#allocation5], 1
    %288 = vsyncpa %s287, 1
    %289 = vsyncpa [#allocation8], 1
    %290 = vsyncpa [#allocation6], 1
    %s291 = scalar_lea.sflag [#allocation6], 1
    %292 = vsyncpa %s291, 1

</llo_original>
